<compile_context>
chip_gen: v5e
topology: v5e:2x2
jax: 0.10.0
libtpu: 0.0.40
codegen_flags: <defaults>
</compile_context>

<pallas_src>
from dataclasses import dataclass
from typing import Optional

import jax
import jax.numpy as jnp
from jax import lax
from jax.experimental import pallas as pl
from jax.experimental.pallas import tpu as pltpu


@dataclass
class PoolingOutput:
    x: jax.Array
    edge_index: jax.Array
    edge_attr: Optional[jax.Array] = None
    batch: Optional[jax.Array] = None


# ---------------------------------------------------------------------------
# Fused Select + Reduce + batch-remap kernel, tiled over node tiles (grid axis).
#   scores     = x_tile @ W_select                    (MXU, bf16 in / f32 acc)
#   cluster    = first-max argmax over clusters
#   acc[K, D] += one_hot_T(cluster) @ x_tile          (MXU, bf16 in / f32 acc)
#   cnt[K, 1] += per-cluster counts
#   bpick[K,1] = max batch id seen per cluster (-1 if none)
#   last step : xpool = acc / max(cnt, 1);  new_batch = where(assigned, bpick, k)
# ---------------------------------------------------------------------------
def _select_reduce_kernel(x_ref, w_ref, batch_ref,
                          xpool_ref, cluster_ref, newbatch_ref,
                          acc_ref, cnt_ref, bpick_ref):
    i = pl.program_id(0)
    last = pl.num_programs(0) - 1

    @pl.when(i == 0)
    def _init():
        acc_ref[...] = jnp.zeros_like(acc_ref)
        cnt_ref[...] = jnp.zeros_like(cnt_ref)
        bpick_ref[...] = jnp.full(bpick_ref.shape, -1, jnp.int32)

    x = x_ref[...]                                   # [TN, D] f32
    w = w_ref[...]                                   # [D, K]  f32
    tn = x.shape[0]
    k = w.shape[1]
    x_bf16 = x.astype(jnp.bfloat16)

    # --- Select: scores (MXU) + first-max argmax (f32 elementwise) ---
    scores = jnp.dot(x_bf16, w.astype(jnp.bfloat16),
                     preferred_element_type=jnp.float32)            # [TN, K]
    col = lax.broadcasted_iota(jnp.int32, (tn, k), 1)
    row_max = jnp.max(scores, axis=-1, keepdims=True)
    cluster = jnp.min(jnp.where(scores == row_max, col, k), axis=-1)  # [TN]
    cluster_row = cluster[None, :]                                    # [1, TN]
    cluster_ref[...] = cluster_row                                    # lane-dense

    # --- Reduce: one-hot built transposed [K, TN] -> MXU segment-sum ---
    rowk = lax.broadcasted_iota(jnp.int32, (k, tn), 0)                # [K, TN]
    onehot_t = rowk == cluster_row                                    # bool [K, TN]
    onehot_f = jnp.where(onehot_t, 1.0, 0.0)                          # f32 [K, TN]
    acc_ref[...] += jnp.dot(onehot_f.astype(jnp.bfloat16), x_bf16,
                            preferred_element_type=jnp.float32)       # [K, D]
    cnt_ref[...] += jnp.sum(onehot_f, axis=1, keepdims=True)          # [K, 1]

    # --- batch remap: max batch id per cluster (-1 = never assigned) ---
    # TODO(synk): torch scatter_ keeps an arbitrary source on duplicates; we
    # deterministically keep the max (non-negative) batch id per cluster.
    b = batch_ref[...]                                                # [1, TN] int32
    masked = jnp.where(onehot_t, jnp.broadcast_to(b, (k, tn)), -1)    # [K, TN]
    bpick_ref[...] = jnp.maximum(bpick_ref[...],
                                 jnp.max(masked, axis=1, keepdims=True))

    @pl.when(i == last)
    def _finalize():
        counts = jnp.maximum(cnt_ref[...], 1.0)                       # [K, 1]
        xpool_ref[...] = acc_ref[...] / counts                        # segment mean
        karange = lax.broadcasted_iota(jnp.int32, bpick_ref.shape, 0)  # [K, 1]
        bp = bpick_ref[...]
        newbatch_ref[...] = jnp.where(bp >= 0, bp, karange)


def _pick_tile_n(n: int) -> int:
    # Whole array when small or not 128-divisible (block must then equal the
    # full dim). Otherwise the largest 128-aligned tile (<=512 rows) dividing N.
    # NOTE(v7x): with 64 MiB VMEM and large D, prefer the smaller candidates.
    if n % 128 != 0 or n <= 128:
        return n
    for t in (512, 384, 256, 128):
        if n % t == 0:
            return t
    return n


# ---------------------------------------------------------------------------
# Wrapper
# ---------------------------------------------------------------------------
def pooling_forward(x, edge_index, w_select, edge_attr=None, batch=None,
                    *, tile_n=None, return_cluster=False):
    n, d = x.shape
    k = w_select.shape[1]

    tn = tile_n if tile_n is not None else _pick_tile_n(n)
    assert n % tn == 0 and (tn == n or tn % 128 == 0), (n, tn)
    grid = (n // tn,)

    batch_arr = batch if batch is not None else jnp.zeros((n,), jnp.int32)
    batch2d = batch_arr.astype(jnp.int32)[None, :]

    xpool, cluster2d, newbatch = pl.pallas_call(
        _select_reduce_kernel,
        grid=grid,
        in_specs=[
            pl.BlockSpec((tn, d), lambda i: (i, 0)),   # x: tiled over nodes
            pl.BlockSpec((d, k), lambda i: (0, 0)),    # W_select: resident
            pl.BlockSpec((1, tn), lambda i: (0, i)),   # batch: tiled over nodes
        ],
        out_specs=[
            pl.BlockSpec((k, d), lambda i: (0, 0)),    # pooled x (resident acc out)
            pl.BlockSpec((1, tn), lambda i: (0, i)),   # cluster per tile (lane-dense)
            pl.BlockSpec((k, 1), lambda i: (0, 0)),    # new batch (resident)
        ],
        out_shape=(
            jax.ShapeDtypeStruct((k, d), jnp.float32),
            jax.ShapeDtypeStruct((1, n), jnp.int32),
            jax.ShapeDtypeStruct((k, 1), jnp.int32),
        ),
        scratch_shapes=[
            pltpu.VMEM((k, d), jnp.float32),   # pooled-sum accumulator
            pltpu.VMEM((k, 1), jnp.float32),   # per-cluster counts
            pltpu.VMEM((k, 1), jnp.int32),     # max batch id per cluster
        ],
        compiler_params=pltpu.CompilerParams(
            dimension_semantics=("arbitrary",)),       # node axis is a reduction
    )(x, w_select, batch2d)

    cluster = cluster2d[0]                             # [N] int32

    # Connect: remap edge endpoints through the cluster vector. Pure
    # data-dependent gather -> single O(E) XLA gather (replaces the previous
    # O(E*N) in-kernel one-hot, per perf review).
    new_edge = cluster[edge_index]                     # [2, E] int32

    # TODO(synk): a generic Connect may also coalesce duplicate coarse edges;
    # edges are returned un-coalesced and edge_attr is passed through unchanged.
    out_batch = newbatch[:, 0] if batch is not None else None
    out = PoolingOutput(x=xpool, edge_index=new_edge,
                        edge_attr=edge_attr, batch=out_batch)
    if return_cluster:
        return out, cluster
    return out


if __name__ == "__main__":
    N, D, K, E = 256, 64, 8, 512   # nodes, features, clusters, edges

    key = jax.random.PRNGKey(0)
    kx, kw, ke, ka = jax.random.split(key, 4)

    x = jax.random.normal(kx, (N, D), dtype=jnp.float32)
    w_select = jax.random.normal(kw, (D, K), dtype=jnp.float32) * 0.1   # "learned" Select
    edge_index = jax.random.randint(ke, (2, E), 0, N, dtype=jnp.int32)
    edge_attr = jax.random.normal(ka, (E, 4), dtype=jnp.float32)
    batch = jnp.concatenate([jnp.zeros((N // 2,), jnp.int32),
                             jnp.ones((N - N // 2,), jnp.int32)])

    out, cluster = pooling_forward(x, edge_index, w_select,
                                   edge_attr=edge_attr, batch=batch,
                                   tile_n=128,          # grid=(2,) exercises accumulation
                                   return_cluster=True)
    jax.block_until_ready((out.x, out.edge_index, out.batch, cluster))

    # shape checks
    assert out.x.shape == (K, D)
    assert out.edge_index.shape == (2, E)
    assert out.batch.shape == (K,)
    assert cluster.shape == (N,)
    assert bool(jnp.all((cluster >= 0) & (cluster < K)))

    # pure-JAX reference, given the kernel's cluster assignment
    onehot = (cluster[:, None] == jnp.arange(K)[None, :]).astype(jnp.float32)
    counts = onehot.sum(axis=0)
    ref_x = (onehot.T @ x) / jnp.maximum(counts, 1.0)[:, None]
    assert jnp.allclose(out.x, ref_x, rtol=1e-1, atol=1e-1), "pooled features mismatch"
    assert bool(jnp.all(out.edge_index == cluster[edge_index]))
    picked = jnp.max(jnp.where(onehot > 0, batch[:, None], -1), axis=0)
    ref_batch = jnp.where(counts > 0, picked, jnp.arange(K))
    assert bool(jnp.all(out.batch == ref_batch))

    print("KERNEL_OK")
</pallas_src>

<mosaic_0001>
module attributes {stable_mosaic.version = 11 : i64} {
  func.func @_select_reduce_kernel(%arg0: i32, %arg1: memref<128x64xf32, #tpu.memory_space<vmem>>, %arg2: memref<64x8xf32, #tpu.memory_space<vmem>>, %arg3: memref<1x128xi32, #tpu.memory_space<vmem>>, %arg4: memref<8x64xf32, #tpu.memory_space<vmem>>, %arg5: memref<1x128xi32, #tpu.memory_space<vmem>>, %arg6: memref<8x1xi32, #tpu.memory_space<vmem>>, %arg7: memref<8x64xf32, #tpu.memory_space<vmem>>, %arg8: memref<8x1xf32, #tpu.memory_space<vmem>>, %arg9: memref<8x1xi32, #tpu.memory_space<vmem>>) attributes {dimension_semantics = [#tpu.dimension_semantics<arbitrary>], iteration_bounds = array<i64: 2>, scalar_prefetch = 0 : i64, scratch_operands = 3 : i64, tpu.core_type = #tpu.core_type<tc>, window_params = [{transform_indices = @transform_0, window_bounds = array<i64: 128, 64>}, {pipeline_mode = #tpu.pipeline_mode<synchronous>, transform_indices = @transform_1, window_bounds = array<i64: 64, 8>}, {transform_indices = @transform_2, window_bounds = array<i64: 1, 128>}, {pipeline_mode = #tpu.pipeline_mode<synchronous>, transform_indices = @transform_3, window_bounds = array<i64: 8, 64>}, {transform_indices = @transform_4, window_bounds = array<i64: 1, 128>}, {pipeline_mode = #tpu.pipeline_mode<synchronous>, transform_indices = @transform_5, window_bounds = array<i64: 8, 1>}]} {
    %c0_i32 = arith.constant 0 : i32
    %0 = arith.cmpi eq, %arg0, %c0_i32 : i32
    %1 = arith.extui %0 : i1 to i32
    %c0_i32_0 = arith.constant 0 : i32
    %2 = arith.cmpi ne, %1, %c0_i32_0 : i32
    scf.if %2 {
      %cst_28 = arith.constant 0.000000e+00 : f32
      %47 = vector.broadcast %cst_28 : f32 to vector<8x64xf32>
      %c0_29 = arith.constant 0 : index
      %c0_30 = arith.constant 0 : index
      %48 = vector.load %arg7[%c0_29, %c0_30] : memref<8x64xf32, #tpu.memory_space<vmem>>, vector<8x64xf32>
      tpu.vector_store %arg7[%c0_29, %c0_30], %47 {strides = array<i32>} : memref<8x64xf32, #tpu.memory_space<vmem>>, vector<8x64xf32>,
      %cst_31 = arith.constant 0.000000e+00 : f32
      %49 = vector.broadcast %cst_31 : f32 to vector<8x1xf32>
      %c0_32 = arith.constant 0 : index
      %c0_33 = arith.constant 0 : index
      %50 = vector.load %arg8[%c0_32, %c0_33] : memref<8x1xf32, #tpu.memory_space<vmem>>, vector<8x1xf32>
      tpu.vector_store %arg8[%c0_32, %c0_33], %49 {strides = array<i32>} : memref<8x1xf32, #tpu.memory_space<vmem>>, vector<8x1xf32>,
      %c-1_i32_34 = arith.constant -1 : i32
      %51 = vector.broadcast %c-1_i32_34 : i32 to vector<8x1xi32>
      %c0_35 = arith.constant 0 : index
      %c0_36 = arith.constant 0 : index
      %52 = vector.load %arg9[%c0_35, %c0_36] : memref<8x1xi32, #tpu.memory_space<vmem>>, vector<8x1xi32>
      tpu.vector_store %arg9[%c0_35, %c0_36], %51 {strides = array<i32>} : memref<8x1xi32, #tpu.memory_space<vmem>>, vector<8x1xi32>,
    } else {
    }
    %c0 = arith.constant 0 : index
    %c0_1 = arith.constant 0 : index
    %3 = vector.load %arg1[%c0, %c0_1] : memref<128x64xf32, #tpu.memory_space<vmem>>, vector<128x64xf32>
    %c0_2 = arith.constant 0 : index
    %c0_3 = arith.constant 0 : index
    %4 = vector.load %arg2[%c0_2, %c0_3] : memref<64x8xf32, #tpu.memory_space<vmem>>, vector<64x8xf32>
    %5 = arith.truncf %3 : vector<128x64xf32> to vector<128x64xbf16>
    %6 = arith.truncf %4 : vector<64x8xf32> to vector<64x8xbf16>
    %cst = arith.constant dense<0.000000e+00> : vector<128x8xf32>
    %7 = tpu.matmul %5, %6, %cst {dimension_numbers = #tpu.dot_dimension_numbers<[1], [0], [0], [1], [0, 0, 1, 1], [], []>} : vector<128x64xbf16>, vector<64x8xbf16>, vector<128x8xf32> -> vector<128x8xf32>
    %8 = tpu.iota {dimensions = array<i32: 1>} : vector<128x8xi32>
    %cst_4 = arith.constant dense<0xFF800000> : vector<128xf32>
    %9 = vector.multi_reduction <maximumf>, %7, %cst_4 [1] : vector<128x8xf32> to vector<128xf32>
    %10 = vector.shape_cast %9 : vector<128xf32> to vector<128x1xf32>
    %11 = vector.broadcast %10 : vector<128x1xf32> to vector<128x8xf32>
    %12 = arith.cmpf oeq, %7, %11 : vector<128x8xf32>
    %c8_i32 = arith.constant 8 : i32
    %13 = vector.broadcast %c8_i32 : i32 to vector<128x8xi32>
    %14 = arith.select %12, %8, %13 : vector<128x8xi1>, vector<128x8xi32>
    %cst_5 = arith.constant dense<2147483647> : vector<128xi32>
    %15 = vector.multi_reduction <minsi>, %14, %cst_5 [1] : vector<128x8xi32> to vector<128xi32>
    %16 = vector.shape_cast %15 : vector<128xi32> to vector<1x128xi32>
    %c0_6 = arith.constant 0 : index
    %c0_7 = arith.constant 0 : index
    %17 = vector.load %arg5[%c0_6, %c0_7] : memref<1x128xi32, #tpu.memory_space<vmem>>, vector<1x128xi32>
    tpu.vector_store %arg5[%c0_6, %c0_7], %16 {strides = array<i32>} : memref<1x128xi32, #tpu.memory_space<vmem>>, vector<1x128xi32>,
    %18 = tpu.iota {dimensions = array<i32: 0>} : vector<8x128xi32>
    %19 = vector.broadcast %16 : vector<1x128xi32> to vector<8x128xi32>
    %20 = arith.cmpi eq, %18, %19 : vector<8x128xi32>
    %cst_8 = arith.constant 1.000000e+00 : f32
    %cst_9 = arith.constant 0.000000e+00 : f32
    %21 = vector.broadcast %cst_8 : f32 to vector<8x128xf32>
    %22 = vector.broadcast %cst_9 : f32 to vector<8x128xf32>
    %23 = arith.select %20, %21, %22 : vector<8x128xi1>, vector<8x128xf32>
    %c0_10 = arith.constant 0 : index
    %c0_11 = arith.constant 0 : index
    %24 = vector.load %arg7[%c0_10, %c0_11] : memref<8x64xf32, #tpu.memory_space<vmem>>, vector<8x64xf32>
    %25 = arith.truncf %23 : vector<8x128xf32> to vector<8x128xbf16>
    %cst_12 = arith.constant dense<0.000000e+00> : vector<8x64xf32>
    %26 = tpu.matmul %25, %5, %cst_12 {dimension_numbers = #tpu.dot_dimension_numbers<[1], [0], [0], [1], [0, 0, 1, 1], [], []>} : vector<8x128xbf16>, vector<128x64xbf16>, vector<8x64xf32> -> vector<8x64xf32>
    %27 = arith.addf %24, %26 : vector<8x64xf32>
    %c0_13 = arith.constant 0 : index
    %c0_14 = arith.constant 0 : index
    %28 = vector.load %arg7[%c0_13, %c0_14] : memref<8x64xf32, #tpu.memory_space<vmem>>, vector<8x64xf32>
    tpu.vector_store %arg7[%c0_13, %c0_14], %27 {strides = array<i32>} : memref<8x64xf32, #tpu.memory_space<vmem>>, vector<8x64xf32>,
    %c0_15 = arith.constant 0 : index
    %c0_16 = arith.constant 0 : index
    %29 = vector.load %arg8[%c0_15, %c0_16] : memref<8x1xf32, #tpu.memory_space<vmem>>, vector<8x1xf32>
    %cst_17 = arith.constant dense<0.000000e+00> : vector<8xf32>
    %30 = vector.multi_reduction <add>, %23, %cst_17 [1] : vector<8x128xf32> to vector<8xf32>
    %31 = vector.shape_cast %30 : vector<8xf32> to vector<8x1xf32>
    %32 = arith.addf %29, %31 : vector<8x1xf32>
    %c0_18 = arith.constant 0 : index
    %c0_19 = arith.constant 0 : index
    %33 = vector.load %arg8[%c0_18, %c0_19] : memref<8x1xf32, #tpu.memory_space<vmem>>, vector<8x1xf32>
    tpu.vector_store %arg8[%c0_18, %c0_19], %32 {strides = array<i32>} : memref<8x1xf32, #tpu.memory_space<vmem>>, vector<8x1xf32>,
    %c0_20 = arith.constant 0 : index
    %c0_21 = arith.constant 0 : index
    %34 = vector.load %arg3[%c0_20, %c0_21] : memref<1x128xi32, #tpu.memory_space<vmem>>, vector<1x128xi32>
    %35 = vector.shape_cast %34 : vector<1x128xi32> to vector<1x128xi32>
    %36 = vector.broadcast %35 : vector<1x128xi32> to vector<8x128xi32>
    %c-1_i32 = arith.constant -1 : i32
    %37 = vector.broadcast %c-1_i32 : i32 to vector<8x128xi32>
    %38 = arith.select %20, %36, %37 : vector<8x128xi1>, vector<8x128xi32>
    %c0_22 = arith.constant 0 : index
    %c0_23 = arith.constant 0 : index
    %39 = vector.load %arg9[%c0_22, %c0_23] : memref<8x1xi32, #tpu.memory_space<vmem>>, vector<8x1xi32>
    %cst_24 = arith.constant dense<-2147483648> : vector<8xi32>
    %40 = vector.multi_reduction <maxsi>, %38, %cst_24 [1] : vector<8x128xi32> to vector<8xi32>
    %41 = vector.shape_cast %40 : vector<8xi32> to vector<8x1xi32>
    %42 = arith.maxsi %39, %41 : vector<8x1xi32>
    %c0_25 = arith.constant 0 : index
    %c0_26 = arith.constant 0 : index
    %43 = vector.load %arg9[%c0_25, %c0_26] : memref<8x1xi32, #tpu.memory_space<vmem>>, vector<8x1xi32>
    tpu.vector_store %arg9[%c0_25, %c0_26], %42 {strides = array<i32>} : memref<8x1xi32, #tpu.memory_space<vmem>>, vector<8x1xi32>,
    %c1_i32 = arith.constant 1 : i32
    %44 = arith.cmpi eq, %arg0, %c1_i32 : i32
    %45 = arith.extui %44 : i1 to i32
    %c0_i32_27 = arith.constant 0 : i32
    %46 = arith.cmpi ne, %45, %c0_i32_27 : i32
    scf.if %46 {
      %c0_28 = arith.constant 0 : index
      %c0_29 = arith.constant 0 : index
      %47 = vector.load %arg8[%c0_28, %c0_29] : memref<8x1xf32, #tpu.memory_space<vmem>>, vector<8x1xf32>
      %cst_30 = arith.constant 1.000000e+00 : f32
      %48 = vector.broadcast %cst_30 : f32 to vector<8x1xf32>
      %49 = arith.maximumf %47, %48 : vector<8x1xf32>
      %c0_31 = arith.constant 0 : index
      %c0_32 = arith.constant 0 : index
      %50 = vector.load %arg7[%c0_31, %c0_32] : memref<8x64xf32, #tpu.memory_space<vmem>>, vector<8x64xf32>
      %51 = vector.broadcast %49 : vector<8x1xf32> to vector<8x64xf32>
      %52 = arith.divf %50, %51 : vector<8x64xf32>
      %c0_33 = arith.constant 0 : index
      %c0_34 = arith.constant 0 : index
      %53 = vector.load %arg4[%c0_33, %c0_34] : memref<8x64xf32, #tpu.memory_space<vmem>>, vector<8x64xf32>
      tpu.vector_store %arg4[%c0_33, %c0_34], %52 {strides = array<i32>} : memref<8x64xf32, #tpu.memory_space<vmem>>, vector<8x64xf32>,
      %54 = tpu.iota {dimensions = array<i32: 0>} : vector<8x1xi32>
      %c0_35 = arith.constant 0 : index
      %c0_36 = arith.constant 0 : index
      %55 = vector.load %arg9[%c0_35, %c0_36] : memref<8x1xi32, #tpu.memory_space<vmem>>, vector<8x1xi32>
      %c0_i32_37 = arith.constant 0 : i32
      %56 = vector.broadcast %c0_i32_37 : i32 to vector<8x1xi32>
      %57 = arith.cmpi sge, %55, %56 : vector<8x1xi32>
      %58 = arith.select %57, %55, %54 : vector<8x1xi1>, vector<8x1xi32>
      %c0_38 = arith.constant 0 : index
      %c0_39 = arith.constant 0 : index
      %59 = vector.load %arg6[%c0_38, %c0_39] : memref<8x1xi32, #tpu.memory_space<vmem>>, vector<8x1xi32>
      tpu.vector_store %arg6[%c0_38, %c0_39], %58 {strides = array<i32>} : memref<8x1xi32, #tpu.memory_space<vmem>>, vector<8x1xi32>,
    } else {
    }
    return
  }
  func.func @transform_0(%arg0: i32) -> (i32, i32) {
    %c0_i32 = arith.constant 0 : i32
    %c0_i32_0 = arith.constant 0 : i32
    return %arg0, %c0_i32 : i32, i32
  }
  func.func @transform_1(%arg0: i32) -> (i32, i32) {
    %c0_i32 = arith.constant 0 : i32
    %c0_i32_0 = arith.constant 0 : i32
    %c0_i32_1 = arith.constant 0 : i32
    return %c0_i32, %c0_i32_0 : i32, i32
  }
  func.func @transform_2(%arg0: i32) -> (i32, i32) {
    %c0_i32 = arith.constant 0 : i32
    %c0_i32_0 = arith.constant 0 : i32
    return %c0_i32, %arg0 : i32, i32
  }
  func.func @transform_3(%arg0: i32) -> (i32, i32) {
    %c0_i32 = arith.constant 0 : i32
    %c0_i32_0 = arith.constant 0 : i32
    %c0_i32_1 = arith.constant 0 : i32
    return %c0_i32, %c0_i32_0 : i32, i32
  }
  func.func @transform_4(%arg0: i32) -> (i32, i32) {
    %c0_i32 = arith.constant 0 : i32
    %c0_i32_0 = arith.constant 0 : i32
    return %c0_i32, %arg0 : i32, i32
  }
  func.func @transform_5(%arg0: i32) -> (i32, i32) {
    %c0_i32 = arith.constant 0 : i32
    %c0_i32_0 = arith.constant 0 : i32
    %c0_i32_1 = arith.constant 0 : i32
    return %c0_i32, %c0_i32_0 : i32, i32
  }
}

</mosaic_0001>

<llo_original>
// kernel: tpu_custom_call.1
$region0: #{tpu_custom_call.1}
  #allocation0 [shape = 'u32[]', space=smem, size = 0x4, offset = 0x4, fixed_abs, tag = 'smem constant byte address 0x4 - core index']
  #allocation1 [shape = 'u32[72,128]{1,0:T(1,128)}', space=vmem, size = 0x9000, scoped, tag = 'internal scratch']
  #allocation2 [shape = 'f32[8,64]{1,0:T(8,128)}', space=vmem, size = 0x1000, scoped, tag = 'scratch operand']
  #allocation3 [shape = 'f32[8,1]{1,0:T(8,128)}', space=vmem, size = 0x1000, scoped, tag = 'scratch operand']
  #allocation4 [shape = 's32[8,1]{1,0:T(8,128)}', space=vmem, size = 0x1000, scoped, tag = 'scratch operand']
  %s0 = inlined_call_operand.vmem [shape: f32[256,64], index: 0, kind: input, shape index: {}]
  %s1 = inlined_call_operand.vmem [shape: f32[64,8], index: 1, kind: input, shape index: {}]
  %s2 = inlined_call_operand.vmem [shape: s32[1,256], index: 2, kind: input, shape index: {}]
  %s3 = inlined_call_operand.hbm [shape: f32[8,64], index: 3, kind: output, shape index: {0}]
  %s4 = inlined_call_operand.hbm [shape: s32[1,256], index: 4, kind: output, shape index: {1}]
  %s5 = inlined_call_operand.vmem [shape: s32[8,1], index: 5, kind: output, shape index: {2}]
  %6 = xla_tuple %s3, %s4, %s5
  %s7 = sld [smem:[#allocation0]]
  $region69: #{tpu_custom_call.1} parent=0
    _
  %s9 = ssub.s32 1, %s7
  %s10 = scalar_select 0, %s9, %s7
  $region1: #{tpu_custom_call.1} parent=0
    #allocation5 [shape = 'u8[4096]{0}', space=vmem, size = 0x1000, scoped, tag = 'output window, operand 0, single buffered']
    #allocation6 [shape = 's32[2]{0}', space=sflag, size = 0x8, scoped, tag = 'scoped memory for tpu_custom_call.1']
    #allocation7 [shape = 'u8[1024]{0}', space=vmem, size = 0x400, scoped, tag = 'output window, operand 1']
    #allocation8 [shape = 's32[2]{0}', space=sflag, size = 0x8, scoped, tag = 'scoped memory for tpu_custom_call.1']
    %11 = vsyncpa [#allocation6], 0
    %12 = vsyncpa [#allocation8], 0
    %s13 = scalar_lea.sflag [#allocation8], 1
    %14 = vsyncpa %s13, 0
    loop: start=0, step=1, limit=4
    $region2: #{tpu_custom_call.1} parent=1 // loop_pre_header
      _
    $region3: #{tpu_custom_call.1} parent=1 // loop_header
      %s16 = sphi 0, %s20
      %p17 = scmp.ge.s32.totalorder %s16, 4
      %s26 = sphi 0, %s28
      %s29 = sphi 0, %s26
      %s30 = sphi 0, %s29
      %s46 = sphi 0, %s30
      %s50 = sphi 0, %s50
      %s52 = sphi 0, %s50
      %s53 = sphi 0, %s52
      %s67 = sphi 0, %s53
      %s73 = sphi 0, %s75
      %s76 = sphi 0, %s73
      %s77 = sphi 0, %s76
      %s93 = sphi 0, %s77
      %s97 = sphi 0, %s97
      %s99 = sphi 0, %s97
      %s100 = sphi 0, %s99
      %s114 = sphi 0, %s100
      %s120 = sphi 0, %s122
      %s123 = sphi 0, %s120
      %s124 = sphi 0, %s123
      %s140 = sphi 0, %s124
      %s144 = sphi 0, %s144
      %s146 = sphi 0, %s144
      %s147 = sphi 0, %s146
      %s161 = sphi 0, %s147
    $region4: #{tpu_custom_call.1} parent=1 // loop_header_branch
      %19 = sbr.rel (%p17) target = $region8
    $region5: #{tpu_custom_call.1} parent=1 // loop_body
      %s21 = ssub.s32 %s16, 1
      %s22 = ssub.s32 %s16, 2
      %s23 = sadd.s32 %s16, 1
      %s24 = ssub.s32 %s16, %s23
      %p25 = scmp.eq.s32.totalorder %s24, 0
      %s27 = sadd.s32 %s26, 1
      %s28 = scalar_select %p25, %s26, %s27
      %p31 = pneg %p25
      %p32 = scmp.eq.s32.totalorder %s16, 1
      %p33 = por %p31, %p32
      %p34 = scmp.ne.s32.totalorder %s26, %s29
      %p35 = scmp.eq.s32.totalorder %s16, 0
      %p36 = por %p34, %p35
      %p37 = scmp.ne.s32.totalorder %s26, %s29
      %p38 = scmp.eq.s32.totalorder %s21, 1
      %p39 = por %p37, %p38
      %p40 = scmp.ne.s32.totalorder %s29, %s30
      %p41 = scmp.eq.s32.totalorder %s21, 0
      %p42 = por %p40, %p41
      %p43 = scmp.ne.s32.totalorder %s29, %s30
      %p44 = scmp.eq.s32.totalorder %s22, 1
      %p45 = por %p43, %p44
      %p47 = scmp.ne.s32.totalorder %s30, %s46
      %p48 = scmp.eq.s32.totalorder %s22, 0
      %p49 = por %p47, %p48
      %s51 = sadd.s32 %s50, 1
      %p54 = scmp.eq.s32.totalorder %s16, 1
      %p55 = scmp.ne.s32.totalorder %s50, %s52
      %p56 = scmp.eq.s32.totalorder %s16, 0
      %p57 = por %p55, %p56
      %p58 = scmp.ne.s32.totalorder %s50, %s52
      %p59 = scmp.eq.s32.totalorder %s21, 1
      %p60 = por %p58, %p59
      %p61 = scmp.ne.s32.totalorder %s52, %s53
      %p62 = scmp.eq.s32.totalorder %s21, 0
      %p63 = por %p61, %p62
      %p64 = scmp.ne.s32.totalorder %s52, %s53
      %p65 = scmp.eq.s32.totalorder %s22, 1
      %p66 = por %p64, %p65
      %p68 = scmp.ne.s32.totalorder %s53, %s67
      %p69 = scmp.eq.s32.totalorder %s22, 0
      %p70 = por %p68, %p69
      %s71 = ssub.s32 %s16, %s23
      %p72 = scmp.eq.s32.totalorder %s71, 0
      %s74 = sadd.s32 %s73, 1
      %s75 = scalar_select %p72, %s73, %s74
      %p78 = pneg %p72
      %p79 = scmp.eq.s32.totalorder %s16, 1
      %p80 = por %p78, %p79
      %p81 = scmp.ne.s32.totalorder %s73, %s76
      %p82 = scmp.eq.s32.totalorder %s16, 0
      %p83 = por %p81, %p82
      %p84 = scmp.ne.s32.totalorder %s73, %s76
      %p85 = scmp.eq.s32.totalorder %s21, 1
      %p86 = por %p84, %p85
      %p87 = scmp.ne.s32.totalorder %s76, %s77
      %p88 = scmp.eq.s32.totalorder %s21, 0
      %p89 = por %p87, %p88
      %p90 = scmp.ne.s32.totalorder %s76, %s77
      %p91 = scmp.eq.s32.totalorder %s22, 1
      %p92 = por %p90, %p91
      %p94 = scmp.ne.s32.totalorder %s77, %s93
      %p95 = scmp.eq.s32.totalorder %s22, 0
      %p96 = por %p94, %p95
      %s98 = sadd.s32 %s97, 1
      %p101 = scmp.eq.s32.totalorder %s16, 1
      %p102 = scmp.ne.s32.totalorder %s97, %s99
      %p103 = scmp.eq.s32.totalorder %s16, 0
      %p104 = por %p102, %p103
      %p105 = scmp.ne.s32.totalorder %s97, %s99
      %p106 = scmp.eq.s32.totalorder %s21, 1
      %p107 = por %p105, %p106
      %p108 = scmp.ne.s32.totalorder %s99, %s100
      %p109 = scmp.eq.s32.totalorder %s21, 0
      %p110 = por %p108, %p109
      %p111 = scmp.ne.s32.totalorder %s99, %s100
      %p112 = scmp.eq.s32.totalorder %s22, 1
      %p113 = por %p111, %p112
      %p115 = scmp.ne.s32.totalorder %s100, %s114
      %p116 = scmp.eq.s32.totalorder %s22, 0
      %p117 = por %p115, %p116
      %s118 = ssub.s32 %s16, %s23
      %p119 = scmp.eq.s32.totalorder %s118, 0
      %s121 = sadd.s32 %s120, 1
      %s122 = scalar_select %p119, %s120, %s121
      %p125 = pneg %p119
      %p126 = scmp.eq.s32.totalorder %s16, 1
      %p127 = por %p125, %p126
      %p128 = scmp.ne.s32.totalorder %s120, %s123
      %p129 = scmp.eq.s32.totalorder %s16, 0
      %p130 = por %p128, %p129
      %p131 = scmp.ne.s32.totalorder %s120, %s123
      %p132 = scmp.eq.s32.totalorder %s21, 1
      %p133 = por %p131, %p132
      %p134 = scmp.ne.s32.totalorder %s123, %s124
      %p135 = scmp.eq.s32.totalorder %s21, 0
      %p136 = por %p134, %p135
      %p137 = scmp.ne.s32.totalorder %s123, %s124
      %p138 = scmp.eq.s32.totalorder %s22, 1
      %p139 = por %p137, %p138
      %p141 = scmp.ne.s32.totalorder %s124, %s140
      %p142 = scmp.eq.s32.totalorder %s22, 0
      %p143 = por %p141, %p142
      %s145 = sadd.s32 %s144, 1
      %p148 = scmp.eq.s32.totalorder %s16, 1
      %p149 = scmp.ne.s32.totalorder %s144, %s146
      %p150 = scmp.eq.s32.totalorder %s16, 0
      %p151 = por %p149, %p150
      %p152 = scmp.ne.s32.totalorder %s144, %s146
      %p153 = scmp.eq.s32.totalorder %s21, 1
      %p154 = por %p152, %p153
      %p155 = scmp.ne.s32.totalorder %s146, %s147
      %p156 = scmp.eq.s32.totalorder %s21, 0
      %p157 = por %p155, %p156
      %p158 = scmp.ne.s32.totalorder %s146, %s147
      %p159 = scmp.eq.s32.totalorder %s22, 1
      %p160 = por %p158, %p159
      %p162 = scmp.ne.s32.totalorder %s147, %s161
      %p163 = scmp.eq.s32.totalorder %s22, 0
      %p164 = por %p162, %p163
      %p165 = scmp.le.s32.totalorder 1, %s16
      %p166 = scmp.lt.s32.totalorder %s16, 3
      %p167 = pnand %p165, %p166
      %p168 = pneg %p167
      // Predicated region
      $region9: #{tpu_custom_call.1} parent=5 // pred_check
        _
      $region10: #{tpu_custom_call.1} parent=5 // pred_check_branch
        %170 = sbr.rel (%p167) target = $region12
      $region11: #{tpu_custom_call.1} parent=5 // pred_region
        %s171 = ssub.s32 %s16, 1
        // Predicated region
        $region13: #{tpu_custom_call.1} parent=11 // pred_check
          %p172 = pneg %p63
        $region14: #{tpu_custom_call.1} parent=11 // pred_check_branch
          %174 = sbr.rel (%p172) target = $region16
        $region15: #{tpu_custom_call.1} parent=11 // pred_region
          _
        $region16: #{tpu_custom_call.1} parent=11 // pred_fallthru
          _
      $region12: #{tpu_custom_call.1} parent=5 // pred_fallthru
        _
      %p175 = scmp.lt.s32.totalorder %s16, 2
      // Predicated region
      $region17: #{tpu_custom_call.1} parent=5 // pred_check
        %p176 = pneg %p175
      $region18: #{tpu_custom_call.1} parent=5 // pred_check_branch
        %178 = sbr.rel (%p176) target = $region20
      $region19: #{tpu_custom_call.1} parent=5 // pred_region
        // Predicated region
        $region21: #{tpu_custom_call.1} parent=19 // pred_check
          %p179 = pneg %p36
        $region22: #{tpu_custom_call.1} parent=19 // pred_check_branch
          %181 = sbr.rel (%p179) target = $region24
        $region23: #{tpu_custom_call.1} parent=19 // pred_region
          %s182 = smul.u32 16, %s16
          %p183 = scmp.lt.s32.totalorder %s182, 31
          %s184 = scalar_select %p183, %s182, 31
          %s185 = smul.addr %s184, 8
          %s186 = scalar_lea.vmem %s0, %s185
          %s187 = smul.u32 16, %s16
        $region24: #{tpu_custom_call.1} parent=19 // pred_fallthru
          _
        // Predicated region
        $region25: #{tpu_custom_call.1} parent=19 // pred_check
          %p188 = pneg %p83
        $region26: #{tpu_custom_call.1} parent=19 // pred_check_branch
          %190 = sbr.rel (%p188) target = $region28
        $region27: #{tpu_custom_call.1} parent=19 // pred_region
          %p191 = scmp.lt.s32.totalorder %s16, 1
          %s192 = scalar_select %p191, %s16, 1
          %s193 = scalar_lea.vmem %s2, %s192
        $region28: #{tpu_custom_call.1} parent=19 // pred_fallthru
          _
      $region20: #{tpu_custom_call.1} parent=5 // pred_fallthru
        _
      %p194 = scmp.le.s32.totalorder 1, %s16
      %p195 = scmp.lt.s32.totalorder %s16, 3
      %p196 = pnand %p194, %p195
      %p197 = pneg %p196
      // Predicated region
      $region29: #{tpu_custom_call.1} parent=5 // pred_check
        _
      $region30: #{tpu_custom_call.1} parent=5 // pred_check_branch
        %199 = sbr.rel (%p196) target = $region32
      $region31: #{tpu_custom_call.1} parent=5 // pred_region
        %s200 = ssub.s32 %s16, 1
        %s201 = smul.u32 16, %s21
        %p202 = scmp.lt.s32.totalorder %s201, 31
        %s203 = scalar_select %p202, %s201, 31
        %s204 = smul.addr %s203, 8
        %s205 = scalar_lea.vmem %s0, %s204
        %p206 = pneg %p42
        %p207 = pneg %p39
        %p208 = pneg %p63
        %p209 = pneg %p60
        %p210 = scmp.lt.s32.totalorder %s21, 1
        %s211 = scalar_select %p210, %s21, 1
        %s212 = scalar_lea.vmem %s2, %s211
        %p213 = pneg %p89
        %p214 = pneg %p86
        %p215 = pneg %p110
        %p216 = pneg %p107
        %p217 = pneg %p136
        %p218 = pneg %p133
        %s219 = sand.u32 %s123, 1
        %s220 = scalar_lea.sflag [#allocation8], %s219
        %s221 = sand.u32 %s123, 1
        %s222 = scalar_lea.vmem [#allocation7], %s221
        %p223 = pneg %p157
        %p224 = pneg %p154
        %s225 = smul.u32 16, %s21
        %p226 = scmp.lt.s32.totalorder %s225, 31
        %s227 = scalar_select %p226, %s225, 31
        %s228 = smul.addr %s227, 8
        %s229 = scalar_lea.vmem %s0, %s228
        %s230 = smul.u32 16, %s21
        %p231 = scmp.lt.s32.totalorder %s21, 1
        %s232 = scalar_select %p231, %s21, 1
        %s233 = scalar_lea.vmem %s2, %s232
        %p235 = scmp.eq.s32.totalorder %s21, 0
        // Predicated region
        $region33: #{tpu_custom_call.1} parent=31 // pred_check
          %p236 = pneg %p235
        $region34: #{tpu_custom_call.1} parent=31 // pred_check_branch
          %238 = sbr.rel (%p236) target = $region36
        $region35: #{tpu_custom_call.1} parent=31 // pred_region
          %vm239 = vcmask 523264
          %240 = vst.msk [vmem:[#allocation2] sm:$0xff] %vm239, 0.0
          %vm241 = vcmask 7168
          %242 = vst.msk [vmem:[#allocation3] sm:$0xff] %vm241, 0.0
          %243 = vst.msk [vmem:[#allocation4] sm:$0xff] %vm241, 4294967295
        $region36: #{tpu_custom_call.1} parent=31 // pred_fallthru
          _
        %v244 = vld [vmem:[%s229] sm:$0xff]
        %v245 = vld [vmem:[%s229 + $0x8] sm:$0xff]
        %v246 = vld [vmem:[%s229 + $0x10] sm:$0xff]
        %v247 = vld [vmem:[%s229 + $0x18] sm:$0xff]
        %v248 = vld [vmem:[%s229 + $0x20] sm:$0xff]
        %v249 = vld [vmem:[%s229 + $0x28] sm:$0xff]
        %v250 = vld [vmem:[%s229 + $0x30] sm:$0xff]
        %v251 = vld [vmem:[%s229 + $0x38] sm:$0xff]
        %v252 = vld [vmem:[%s229 + $0x40] sm:$0xff]
        %v253 = vld [vmem:[%s229 + $0x48] sm:$0xff]
        %v254 = vld [vmem:[%s229 + $0x50] sm:$0xff]
        %v255 = vld [vmem:[%s229 + $0x58] sm:$0xff]
        %v256 = vld [vmem:[%s229 + $0x60] sm:$0xff]
        %v257 = vld [vmem:[%s229 + $0x68] sm:$0xff]
        %v258 = vld [vmem:[%s229 + $0x70] sm:$0xff]
        %v259 = vld [vmem:[%s229 + $0x78] sm:$0xff]
        %v260 = vld [vmem:[%s1] sm:$0xff]
        %v261 = vld [vmem:[%s1 + $0x8] sm:$0xff]
        %v262 = vld [vmem:[%s1 + $0x10] sm:$0xff]
        %v263 = vld [vmem:[%s1 + $0x18] sm:$0xff]
        %v264 = vld [vmem:[%s1 + $0x20] sm:$0xff]
        %v265 = vld [vmem:[%s1 + $0x28] sm:$0xff]
        %v266 = vld [vmem:[%s1 + $0x30] sm:$0xff]
        %v267 = vld [vmem:[%s1 + $0x38] sm:$0xff]
        %v268 = vpack.c.bf16 %v245, %v244
        %v269 = vpack.c.bf16 %v247, %v246
        %v270 = vpack.c.bf16 %v249, %v248
        %v271 = vpack.c.bf16 %v251, %v250
        %v272 = vpack.c.bf16 %v253, %v252
        %v273 = vpack.c.bf16 %v255, %v254
        %v274 = vpack.c.bf16 %v257, %v256
        %v275 = vpack.c.bf16 %v259, %v258
        %v276 = vpack.c.bf16 %v261, %v260
        %v277 = vpack.c.bf16 %v263, %v262
        %v278 = vpack.c.bf16 %v265, %v264
        %v279 = vpack.c.bf16 %v267, %v266
        %vm280 = vcmask 523264
        %v282 = vsel %vm280, %v268, 0
        %v285 = vsel %vm280, %v269, 0
        %v288 = vsel %vm280, %v270, 0
        %v291 = vsel %vm280, %v271, 0
        %v294 = vsel %vm280, %v272, 0
        %v297 = vsel %vm280, %v273, 0
        %v300 = vsel %vm280, %v274, 0
        %v303 = vsel %vm280, %v275, 0
        %305 = vmatpush.bf16.msra.mxu0 0
        %306 = vmatpush.bf16.msra.mxu0 0
        %307 = vmatpush.bf16.msra.mxu0 0
        %308 = vmatpush.bf16.msra.mxu0 0
        %309 = vmatpush.bf16.msra.mxu0 %v279
        %310 = vmatpush.bf16.msra.mxu0 %v278
        %311 = vmatpush.bf16.msra.mxu0 %v277
        %312 = vmatpush.bf16.msra.mxu0 %v276
        %313 = vmatmul.bf16.gmra.mxu0 %v282
        %v314 = vpop.f32.mrf.mxu0
        %v315 = vadd.f32 0.0, %v314
        %v316 = vpop.f32.mrf.mxu0
        %v317 = vadd.f32 0.0, %v316
        %318 = vmatmul.bf16.gmra.mxu0 %v285
        %v319 = vpop.f32.mrf.mxu0
        %v320 = vadd.f32 0.0, %v319
        %v321 = vpop.f32.mrf.mxu0
        %v322 = vadd.f32 0.0, %v321
        %323 = vmatmul.bf16.gmra.mxu0 %v288
        %v324 = vpop.f32.mrf.mxu0
        %v325 = vadd.f32 0.0, %v324
        %v326 = vpop.f32.mrf.mxu0
        %v327 = vadd.f32 0.0, %v326
        %328 = vmatmul.bf16.gmra.mxu0 %v291
        %v329 = vpop.f32.mrf.mxu0
        %v330 = vadd.f32 0.0, %v329
        %v331 = vpop.f32.mrf.mxu0
        %v332 = vadd.f32 0.0, %v331
        %333 = vmatmul.bf16.gmra.mxu0 %v294
        %v334 = vpop.f32.mrf.mxu0
        %v335 = vadd.f32 0.0, %v334
        %v336 = vpop.f32.mrf.mxu0
        %v337 = vadd.f32 0.0, %v336
        %338 = vmatmul.bf16.gmra.mxu0 %v297
        %v339 = vpop.f32.mrf.mxu0
        %v340 = vadd.f32 0.0, %v339
        %v341 = vpop.f32.mrf.mxu0
        %v342 = vadd.f32 0.0, %v341
        %343 = vmatmul.bf16.gmra.mxu0 %v300
        %v344 = vpop.f32.mrf.mxu0
        %v345 = vadd.f32 0.0, %v344
        %v346 = vpop.f32.mrf.mxu0
        %v347 = vadd.f32 0.0, %v346
        %348 = vmatmul.bf16.gmra.mxu0 %v303
        %v349 = vpop.f32.mrf.mxu0
        %v350 = vadd.f32 0.0, %v349
        %v351 = vpop.f32.mrf.mxu0
        %v352 = vadd.f32 0.0, %v351
        %353 = vdwg.mxu0
        %v354 = vlaneseq
        %v355 = vand.u32 %v354, 127
        %vm356 = vcmask 64512
        %v357 = vsel %vm356, %v315, -inf
        %358 = vmax.xlane.f32.xlu0 %v357
        %v359 = vpop.xlane.xlu0 %358
        %v360 = vsel %vm356, %v317, -inf
        %361 = vmax.xlane.f32.xlu0 %v360
        %v362 = vpop.xlane.xlu0 %361
        %v363 = vsel %vm356, %v320, -inf
        %364 = vmax.xlane.f32.xlu0 %v363
        %v365 = vpop.xlane.xlu0 %364
        %v366 = vsel %vm356, %v322, -inf
        %367 = vmax.xlane.f32.xlu0 %v366
        %v368 = vpop.xlane.xlu0 %367
        %v369 = vsel %vm356, %v325, -inf
        %370 = vmax.xlane.f32.xlu0 %v369
        %v371 = vpop.xlane.xlu0 %370
        %v372 = vsel %vm356, %v327, -inf
        %373 = vmax.xlane.f32.xlu0 %v372
        %v374 = vpop.xlane.xlu0 %373
        %v375 = vsel %vm356, %v330, -inf
        %376 = vmax.xlane.f32.xlu0 %v375
        %v377 = vpop.xlane.xlu0 %376
        %v378 = vsel %vm356, %v332, -inf
        %379 = vmax.xlane.f32.xlu0 %v378
        %v380 = vpop.xlane.xlu0 %379
        %v381 = vsel %vm356, %v335, -inf
        %382 = vmax.xlane.f32.xlu0 %v381
        %v383 = vpop.xlane.xlu0 %382
        %v384 = vsel %vm356, %v337, -inf
        %385 = vmax.xlane.f32.xlu0 %v384
        %v386 = vpop.xlane.xlu0 %385
        %v387 = vsel %vm356, %v340, -inf
        %388 = vmax.xlane.f32.xlu0 %v387
        %v389 = vpop.xlane.xlu0 %388
        %v390 = vsel %vm356, %v342, -inf
        %391 = vmax.xlane.f32.xlu0 %v390
        %v392 = vpop.xlane.xlu0 %391
        %v393 = vsel %vm356, %v345, -inf
        %394 = vmax.xlane.f32.xlu0 %v393
        %v395 = vpop.xlane.xlu0 %394
        %v396 = vsel %vm356, %v347, -inf
        %397 = vmax.xlane.f32.xlu0 %v396
        %v398 = vpop.xlane.xlu0 %397
        %v399 = vsel %vm356, %v350, -inf
        %400 = vmax.xlane.f32.xlu0 %v399
        %v401 = vpop.xlane.xlu0 %400
        %v402 = vsel %vm356, %v352, -inf
        %403 = vmax.xlane.f32.xlu0 %v402
        %v404 = vpop.xlane.xlu0 %403
        %vm405 = vcmp.eq.f32.partialorder %v315, %v359
        %vm406 = vcmp.eq.f32.partialorder %v317, %v362
        %vm407 = vcmp.eq.f32.partialorder %v320, %v365
        %vm408 = vcmp.eq.f32.partialorder %v322, %v368
        %vm409 = vcmp.eq.f32.partialorder %v325, %v371
        %vm410 = vcmp.eq.f32.partialorder %v327, %v374
        %vm411 = vcmp.eq.f32.partialorder %v330, %v377
        %vm412 = vcmp.eq.f32.partialorder %v332, %v380
        %vm413 = vcmp.eq.f32.partialorder %v335, %v383
        %vm414 = vcmp.eq.f32.partialorder %v337, %v386
        %vm415 = vcmp.eq.f32.partialorder %v340, %v389
        %vm416 = vcmp.eq.f32.partialorder %v342, %v392
        %vm417 = vcmp.eq.f32.partialorder %v345, %v395
        %vm418 = vcmp.eq.f32.partialorder %v347, %v398
        %vm419 = vcmp.eq.f32.partialorder %v350, %v401
        %vm420 = vcmp.eq.f32.partialorder %v352, %v404
        %v421 = vsel %vm405, %v355, 8
        %v422 = vsel %vm406, %v355, 8
        %v423 = vsel %vm407, %v355, 8
        %v424 = vsel %vm408, %v355, 8
        %v425 = vsel %vm409, %v355, 8
        %v426 = vsel %vm410, %v355, 8
        %v427 = vsel %vm411, %v355, 8
        %v428 = vsel %vm412, %v355, 8
        %v429 = vsel %vm413, %v355, 8
        %v430 = vsel %vm414, %v355, 8
        %v431 = vsel %vm415, %v355, 8
        %v432 = vsel %vm416, %v355, 8
        %v433 = vsel %vm417, %v355, 8
        %v434 = vsel %vm418, %v355, 8
        %v435 = vsel %vm419, %v355, 8
        %v436 = vsel %vm420, %v355, 8
        %v437 = vsel %vm356, %v421, 2147483647
        %v438 = vand.u32 %v437, 65535
        %v439 = vshra.s32 %v437, 16
        %v440 = vcvt.s32.f32 %v438
        %v441 = vcvt.s32.f32 %v439
        %442 = vmin.xlane.f32.xlu0 %v441
        %v443 = vpop.xlane.xlu0 %442
        %vm444 = vcmp.eq.f32.partialorder %v441, %v443
        %v445 = vsel %vm444, %v440, inf
        %446 = vmin.xlane.f32.xlu0 %v445
        %v447 = vpop.xlane.xlu0 %446
        %v448 = vcvt.f32.s32 %v447
        %v449 = vcvt.f32.s32 %v443
        %v450 = vshll.u32 %v449, 16
        %v451 = vadd.s32 %v450, %v448
        %v452 = vsel %vm356, %v422, 2147483647
        %v453 = vand.u32 %v452, 65535
        %v454 = vshra.s32 %v452, 16
        %v455 = vcvt.s32.f32 %v453
        %v456 = vcvt.s32.f32 %v454
        %457 = vmin.xlane.f32.xlu0 %v456
        %v458 = vpop.xlane.xlu0 %457
        %vm459 = vcmp.eq.f32.partialorder %v456, %v458
        %v460 = vsel %vm459, %v455, inf
        %461 = vmin.xlane.f32.xlu0 %v460
        %v462 = vpop.xlane.xlu0 %461
        %v463 = vcvt.f32.s32 %v462
        %v464 = vcvt.f32.s32 %v458
        %v465 = vshll.u32 %v464, 16
        %v466 = vadd.s32 %v465, %v463
        %v467 = vsel %vm356, %v423, 2147483647
        %v468 = vand.u32 %v467, 65535
        %v469 = vshra.s32 %v467, 16
        %v470 = vcvt.s32.f32 %v468
        %v471 = vcvt.s32.f32 %v469
        %472 = vmin.xlane.f32.xlu0 %v471
        %v473 = vpop.xlane.xlu0 %472
        %vm474 = vcmp.eq.f32.partialorder %v471, %v473
        %v475 = vsel %vm474, %v470, inf
        %476 = vmin.xlane.f32.xlu0 %v475
        %v477 = vpop.xlane.xlu0 %476
        %v478 = vcvt.f32.s32 %v477
        %v479 = vcvt.f32.s32 %v473
        %v480 = vshll.u32 %v479, 16
        %v481 = vadd.s32 %v480, %v478
        %v482 = vsel %vm356, %v424, 2147483647
        %v483 = vand.u32 %v482, 65535
        %v484 = vshra.s32 %v482, 16
        %v485 = vcvt.s32.f32 %v483
        %v486 = vcvt.s32.f32 %v484
        %487 = vmin.xlane.f32.xlu0 %v486
        %v488 = vpop.xlane.xlu0 %487
        %vm489 = vcmp.eq.f32.partialorder %v486, %v488
        %v490 = vsel %vm489, %v485, inf
        %491 = vmin.xlane.f32.xlu0 %v490
        %v492 = vpop.xlane.xlu0 %491
        %v493 = vcvt.f32.s32 %v492
        %v494 = vcvt.f32.s32 %v488
        %v495 = vshll.u32 %v494, 16
        %v496 = vadd.s32 %v495, %v493
        %v497 = vsel %vm356, %v425, 2147483647
        %v498 = vand.u32 %v497, 65535
        %v499 = vshra.s32 %v497, 16
        %v500 = vcvt.s32.f32 %v498
        %v501 = vcvt.s32.f32 %v499
        %502 = vmin.xlane.f32.xlu0 %v501
        %v503 = vpop.xlane.xlu0 %502
        %vm504 = vcmp.eq.f32.partialorder %v501, %v503
        %v505 = vsel %vm504, %v500, inf
        %506 = vmin.xlane.f32.xlu0 %v505
        %v507 = vpop.xlane.xlu0 %506
        %v508 = vcvt.f32.s32 %v507
        %v509 = vcvt.f32.s32 %v503
        %v510 = vshll.u32 %v509, 16
        %v511 = vadd.s32 %v510, %v508
        %v512 = vsel %vm356, %v426, 2147483647
        %v513 = vand.u32 %v512, 65535
        %v514 = vshra.s32 %v512, 16
        %v515 = vcvt.s32.f32 %v513
        %v516 = vcvt.s32.f32 %v514
        %517 = vmin.xlane.f32.xlu0 %v516
        %v518 = vpop.xlane.xlu0 %517
        %vm519 = vcmp.eq.f32.partialorder %v516, %v518
        %v520 = vsel %vm519, %v515, inf
        %521 = vmin.xlane.f32.xlu0 %v520
        %v522 = vpop.xlane.xlu0 %521
        %v523 = vcvt.f32.s32 %v522
        %v524 = vcvt.f32.s32 %v518
        %v525 = vshll.u32 %v524, 16
        %v526 = vadd.s32 %v525, %v523
        %v527 = vsel %vm356, %v427, 2147483647
        %v528 = vand.u32 %v527, 65535
        %v529 = vshra.s32 %v527, 16
        %v530 = vcvt.s32.f32 %v528
        %v531 = vcvt.s32.f32 %v529
        %532 = vmin.xlane.f32.xlu0 %v531
        %v533 = vpop.xlane.xlu0 %532
        %vm534 = vcmp.eq.f32.partialorder %v531, %v533
        %v535 = vsel %vm534, %v530, inf
        %536 = vmin.xlane.f32.xlu0 %v535
        %v537 = vpop.xlane.xlu0 %536
        %v538 = vcvt.f32.s32 %v537
        %v539 = vcvt.f32.s32 %v533
        %v540 = vshll.u32 %v539, 16
        %v541 = vadd.s32 %v540, %v538
        %v542 = vsel %vm356, %v428, 2147483647
        %v543 = vand.u32 %v542, 65535
        %v544 = vshra.s32 %v542, 16
        %v545 = vcvt.s32.f32 %v543
        %v546 = vcvt.s32.f32 %v544
        %547 = vmin.xlane.f32.xlu0 %v546
        %v548 = vpop.xlane.xlu0 %547
        %vm549 = vcmp.eq.f32.partialorder %v546, %v548
        %v550 = vsel %vm549, %v545, inf
        %551 = vmin.xlane.f32.xlu0 %v550
        %v552 = vpop.xlane.xlu0 %551
        %v553 = vcvt.f32.s32 %v552
        %v554 = vcvt.f32.s32 %v548
        %v555 = vshll.u32 %v554, 16
        %v556 = vadd.s32 %v555, %v553
        %v557 = vsel %vm356, %v429, 2147483647
        %v558 = vand.u32 %v557, 65535
        %v559 = vshra.s32 %v557, 16
        %v560 = vcvt.s32.f32 %v558
        %v561 = vcvt.s32.f32 %v559
        %562 = vmin.xlane.f32.xlu0 %v561
        %v563 = vpop.xlane.xlu0 %562
        %vm564 = vcmp.eq.f32.partialorder %v561, %v563
        %v565 = vsel %vm564, %v560, inf
        %566 = vmin.xlane.f32.xlu0 %v565
        %v567 = vpop.xlane.xlu0 %566
        %v568 = vcvt.f32.s32 %v567
        %v569 = vcvt.f32.s32 %v563
        %v570 = vshll.u32 %v569, 16
        %v571 = vadd.s32 %v570, %v568
        %v572 = vsel %vm356, %v430, 2147483647
        %v573 = vand.u32 %v572, 65535
        %v574 = vshra.s32 %v572, 16
        %v575 = vcvt.s32.f32 %v573
        %v576 = vcvt.s32.f32 %v574
        %577 = vmin.xlane.f32.xlu0 %v576
        %v578 = vpop.xlane.xlu0 %577
        %vm579 = vcmp.eq.f32.partialorder %v576, %v578
        %v580 = vsel %vm579, %v575, inf
        %581 = vmin.xlane.f32.xlu0 %v580
        %v582 = vpop.xlane.xlu0 %581
        %v583 = vcvt.f32.s32 %v582
        %v584 = vcvt.f32.s32 %v578
        %v585 = vshll.u32 %v584, 16
        %v586 = vadd.s32 %v585, %v583
        %v587 = vsel %vm356, %v431, 2147483647
        %v588 = vand.u32 %v587, 65535
        %v589 = vshra.s32 %v587, 16
        %v590 = vcvt.s32.f32 %v588
        %v591 = vcvt.s32.f32 %v589
        %592 = vmin.xlane.f32.xlu0 %v591
        %v593 = vpop.xlane.xlu0 %592
        %vm594 = vcmp.eq.f32.partialorder %v591, %v593
        %v595 = vsel %vm594, %v590, inf
        %596 = vmin.xlane.f32.xlu0 %v595
        %v597 = vpop.xlane.xlu0 %596
        %v598 = vcvt.f32.s32 %v597
        %v599 = vcvt.f32.s32 %v593
        %v600 = vshll.u32 %v599, 16
        %v601 = vadd.s32 %v600, %v598
        %v602 = vsel %vm356, %v432, 2147483647
        %v603 = vand.u32 %v602, 65535
        %v604 = vshra.s32 %v602, 16
        %v605 = vcvt.s32.f32 %v603
        %v606 = vcvt.s32.f32 %v604
        %607 = vmin.xlane.f32.xlu0 %v606
        %v608 = vpop.xlane.xlu0 %607
        %vm609 = vcmp.eq.f32.partialorder %v606, %v608
        %v610 = vsel %vm609, %v605, inf
        %611 = vmin.xlane.f32.xlu0 %v610
        %v612 = vpop.xlane.xlu0 %611
        %v613 = vcvt.f32.s32 %v612
        %v614 = vcvt.f32.s32 %v608
        %v615 = vshll.u32 %v614, 16
        %v616 = vadd.s32 %v615, %v613
        %v617 = vsel %vm356, %v433, 2147483647
        %v618 = vand.u32 %v617, 65535
        %v619 = vshra.s32 %v617, 16
        %v620 = vcvt.s32.f32 %v618
        %v621 = vcvt.s32.f32 %v619
        %622 = vmin.xlane.f32.xlu0 %v621
        %v623 = vpop.xlane.xlu0 %622
        %vm624 = vcmp.eq.f32.partialorder %v621, %v623
        %v625 = vsel %vm624, %v620, inf
        %626 = vmin.xlane.f32.xlu0 %v625
        %v627 = vpop.xlane.xlu0 %626
        %v628 = vcvt.f32.s32 %v627
        %v629 = vcvt.f32.s32 %v623
        %v630 = vshll.u32 %v629, 16
        %v631 = vadd.s32 %v630, %v628
        %v632 = vsel %vm356, %v434, 2147483647
        %v633 = vand.u32 %v632, 65535
        %v634 = vshra.s32 %v632, 16
        %v635 = vcvt.s32.f32 %v633
        %v636 = vcvt.s32.f32 %v634
        %637 = vmin.xlane.f32.xlu0 %v636
        %v638 = vpop.xlane.xlu0 %637
        %vm639 = vcmp.eq.f32.partialorder %v636, %v638
        %v640 = vsel %vm639, %v635, inf
        %641 = vmin.xlane.f32.xlu0 %v640
        %v642 = vpop.xlane.xlu0 %641
        %v643 = vcvt.f32.s32 %v642
        %v644 = vcvt.f32.s32 %v638
        %v645 = vshll.u32 %v644, 16
        %v646 = vadd.s32 %v645, %v643
        %v647 = vsel %vm356, %v435, 2147483647
        %v648 = vand.u32 %v647, 65535
        %v649 = vshra.s32 %v647, 16
        %v650 = vcvt.s32.f32 %v648
        %v651 = vcvt.s32.f32 %v649
        %652 = vmin.xlane.f32.xlu0 %v651
        %v653 = vpop.xlane.xlu0 %652
        %vm654 = vcmp.eq.f32.partialorder %v651, %v653
        %v655 = vsel %vm654, %v650, inf
        %656 = vmin.xlane.f32.xlu0 %v655
        %v657 = vpop.xlane.xlu0 %656
        %v658 = vcvt.f32.s32 %v657
        %v659 = vcvt.f32.s32 %v653
        %v660 = vshll.u32 %v659, 16
        %v661 = vadd.s32 %v660, %v658
        %v662 = vsel %vm356, %v436, 2147483647
        %v663 = vand.u32 %v662, 65535
        %v664 = vshra.s32 %v662, 16
        %v665 = vcvt.s32.f32 %v663
        %v666 = vcvt.s32.f32 %v664
        %667 = vmin.xlane.f32.xlu0 %v666
        %v668 = vpop.xlane.xlu0 %667
        %vm669 = vcmp.eq.f32.partialorder %v666, %v668
        %v670 = vsel %vm669, %v665, inf
        %671 = vmin.xlane.f32.xlu0 %v670
        %v672 = vpop.xlane.xlu0 %671
        %v673 = vcvt.f32.s32 %v672
        %v674 = vcvt.f32.s32 %v668
        %v675 = vshll.u32 %v674, 16
        %v676 = vadd.s32 %v675, %v673
        %v677 = vperm.slane %v451, %v355
        %v678 = vadd.s32 %v355, 4294967288
        %v679 = vperm.slane %v466, %v678
        %vm680 = vcmask 130112
        %v681 = vsel %vm680, %v679, %v677
        %v682 = vadd.s32 %v355, 4294967280
        %v683 = vperm.slane %v481, %v682
        %vm684 = vcmask 195712
        %v685 = vsel %vm684, %v683, %v681
        %v686 = vadd.s32 %v355, 4294967272
        %v687 = vperm.slane %v496, %v686
        %vm688 = vcmask 261312
        %v689 = vsel %vm688, %v687, %v685
        %v690 = vadd.s32 %v355, 4294967264
        %v691 = vperm.slane %v511, %v690
        %vm692 = vcmask 326912
        %v693 = vsel %vm692, %v691, %v689
        %v694 = vadd.s32 %v355, 4294967256
        %v695 = vperm.slane %v526, %v694
        %vm696 = vcmask 392512
        %v697 = vsel %vm696, %v695, %v693
        %v698 = vadd.s32 %v355, 4294967248
        %v699 = vperm.slane %v541, %v698
        %vm700 = vcmask 458112
        %v701 = vsel %vm700, %v699, %v697
        %v702 = vadd.s32 %v355, 4294967240
        %v703 = vperm.slane %v556, %v702
        %vm704 = vcmask 523712
        %v705 = vsel %vm704, %v703, %v701
        %v706 = vadd.s32 %v355, 4294967232
        %v707 = vperm.slane %v571, %v706
        %vm708 = vcmask 589312
        %v709 = vsel %vm708, %v707, %v705
        %v710 = vadd.s32 %v355, 4294967224
        %v711 = vperm.slane %v586, %v710
        %vm712 = vcmask 654912
        %v713 = vsel %vm712, %v711, %v709
        %v714 = vadd.s32 %v355, 4294967216
        %v715 = vperm.slane %v601, %v714
        %vm716 = vcmask 720512
        %v717 = vsel %vm716, %v715, %v713
        %v718 = vadd.s32 %v355, 4294967208
        %v719 = vperm.slane %v616, %v718
        %vm720 = vcmask 786112
        %v721 = vsel %vm720, %v719, %v717
        %v722 = vadd.s32 %v355, 4294967200
        %v723 = vperm.slane %v631, %v722
        %vm724 = vcmask 851712
        %v725 = vsel %vm724, %v723, %v721
        %v726 = vadd.s32 %v355, 4294967192
        %v727 = vperm.slane %v646, %v726
        %vm728 = vcmask 917312
        %v729 = vsel %vm728, %v727, %v725
        %v730 = vadd.s32 %v355, 4294967184
        %v731 = vperm.slane %v661, %v730
        %vm732 = vcmask 982912
        %v733 = vsel %vm732, %v731, %v729
        %v734 = vadd.s32 %v355, 4294967176
        %v735 = vperm.slane %v676, %v734
        %vm736 = vcmask 1048512
        %v737 = vsel %vm736, %v735, %v733
        %738 = vst [vmem:[%s222] sm:$0x1] %v737
        %v739 = vlaneseq
        %v740 = vshrl.u32 %v739, 7
        %vm741 = vcmask 1042434
        %v742 = vsel %vm741, %v737, %v737
        %vm743 = vcmask 1043459
        %v744 = vsel %vm743, %v737, %v742
        %vm745 = vcmask 1044484
        %v746 = vsel %vm745, %v737, %v744
        %vm747 = vcmask 1045509
        %v748 = vsel %vm747, %v737, %v746
        %vm749 = vcmask 1046534
        %v750 = vsel %vm749, %v737, %v748
        %vm751 = vcmask 1047559
        %v752 = vsel %vm751, %v737, %v750
        %vm753 = vcmp.eq.s32.totalorder %v740, %v752
        %v754 = vsel %vm753, 1.0, 0.0
        %v755 = vld [vmem:[#allocation2] sm:$0xff]
        %v756 = vpack.c.bf16 %v754, %v754
        %757 = vmatpush.bf16.msra.mxu0 %v275
        %758 = vmatpush.bf16.msra.mxu0 %v274
        %759 = vmatpush.bf16.msra.mxu0 %v273
        %760 = vmatpush.bf16.msra.mxu0 %v272
        %761 = vmatpush.bf16.msra.mxu0 %v271
        %762 = vmatpush.bf16.msra.mxu0 %v270
        %763 = vmatpush.bf16.msra.mxu0 %v269
        %764 = vmatpush.bf16.msra.mxu0 %v268
        %765 = vmatmul.bf16.gmra.mxu0 %v756
        %v766 = vpop.f32.mrf.mxu0
        %v767 = vadd.f32 0.0, %v766
        %v768 = vpop.f32.mrf.mxu0
        %769 = vdwg.mxu0
        %v770 = vadd.f32 %v755, %v767
        %771 = vst.msk [vmem:[#allocation2] sm:$0xff] %vm280, %v770
        %v772 = vld [vmem:[#allocation3] sm:$0xff]
        %773 = vadd.xlane.f32.xlu0 %v754
        %v774 = vpop.xlane.xlu0 %773
        %v775 = vadd.f32 %v772, %v774
        %vm776 = vcmask 7168
        %777 = vst.msk [vmem:[#allocation3] sm:$0xff] %vm776, %v775
        %v778 = vld [vmem:[%s233] sm:$0x1]
        %v779 = vperm.slane %v778, 0
        %v780 = vsel %vm753, %v779, 4294967295
        %v781 = vld [vmem:[#allocation4] sm:$0xff]
        %v782 = vand.u32 %v780, 65535
        %v783 = vshra.s32 %v780, 16
        %v784 = vcvt.s32.f32 %v782
        %v785 = vcvt.s32.f32 %v783
        %786 = vmax.xlane.f32.xlu0 %v785
        %v787 = vpop.xlane.xlu0 %786
        %vm788 = vcmp.eq.f32.partialorder %v785, %v787
        %v789 = vsel %vm788, %v784, -inf
        %790 = vmax.xlane.f32.xlu0 %v789
        %v791 = vpop.xlane.xlu0 %790
        %v792 = vcvt.f32.s32 %v791
        %v793 = vcvt.f32.s32 %v787
        %v794 = vshll.u32 %v793, 16
        %v795 = vadd.s32 %v794, %v792
        %vm796 = vcmp.gt.s32.totalorder %v781, %v795
        %v797 = vsel %vm796, %v781, %v795
        %798 = vst.msk [vmem:[#allocation4] sm:$0xff] %vm776, %v797
        %p799 = scmp.eq.s32.totalorder %s21, 1
        // Predicated region
        $region37: #{tpu_custom_call.1} parent=31 // pred_check
          %p800 = pneg %p799
        $region38: #{tpu_custom_call.1} parent=31 // pred_check_branch
          %802 = sbr.rel (%p800) target = $region40
        $region39: #{tpu_custom_call.1} parent=31 // pred_region
          %v803 = vld [vmem:[#allocation3] sm:$0xff]
          %v804 = vmax.f32 %v803, 1.0
          %v805 = vld [vmem:[#allocation2] sm:$0xff]
          %807 = vset.pattern.permute.xlu0 0
          %808 = vperm.xlu0 %807, %v804
          %v809 = vpop.permute.xlu0 %808
          %v811 = vrcp.pop %v809
          %v812 = vmul.f32 %v809, %v811
          %v813 = vsub.f32 1.0, %v812
          %v814 = vmul.f32 %v811, %v813
          %v815 = vadd.f32 %v811, %v814
          %vm816 = vweird.f32 %v809
          %vm817 = vweird.f32 %v811
          %vm818 = vmor %vm816, %vm817
          %v819 = vsel %vm818, %v811, %v815
          %v820 = vand.u32 2147483647, %v809
          %vm821 = vcmp.eq.f32.partialorder %v820, 8.507059e+37
          %v822 = vand.u32 %v809, 2147483648
          %v823 = vor.u32 1.1754944e-38, %v822
          %v824 = vsel %vm821, %v823, %v819
          %v825 = vmul.f32 %v805, %v824
          %826 = vst.msk [vmem:[#allocation5] sm:$0xff] %vm280, %v825
          %v827 = vld [vmem:[#allocation4] sm:$0xff]
          %vm828 = vcmp.ge.s32.totalorder %v827, 0
          %v829 = vsel %vm828, %v827, %v740
          %830 = vst.msk [vmem:[%s5] sm:$0xff] %vm776, %v829
        $region40: #{tpu_custom_call.1} parent=31 // pred_fallthru
          _
        %s831 = sand.u32 %s123, 1
        %s832 = scalar_lea.sflag [#allocation8], %s831
        %s833 = sand.u32 %s123, 1
        %s834 = scalar_lea.vmem [#allocation7], %s833
        // Predicated region
        $region41: #{tpu_custom_call.1} parent=31 // pred_check
          %p835 = pneg %p107
        $region42: #{tpu_custom_call.1} parent=31 // pred_check_branch
          %837 = sbr.rel (%p835) target = $region44
        $region43: #{tpu_custom_call.1} parent=31 // pred_region
          %839 = vsyncadd [#allocation6], 0
          %s841 = sshll.u32 [#allocation5], 4
          %s842 = int_to_ptr.vmem [resolvable:$true] %s841
          %s843 = sshll.u32 %s3, 4
          %s844 = int_to_ptr.hbm [resolvable:$true] %s843
          %846 = dma.vmem_to_hbm [thread:$0]  %s842, 128, %s844, [#allocation6]
        $region44: #{tpu_custom_call.1} parent=31 // pred_fallthru
          _
        // Predicated region
        $region45: #{tpu_custom_call.1} parent=31 // pred_check
          %p847 = pneg %p133
        $region46: #{tpu_custom_call.1} parent=31 // pred_check_branch
          %849 = sbr.rel (%p847) target = $region48
        $region47: #{tpu_custom_call.1} parent=31 // pred_region
          %851 = vsyncadd %s832, 0
          %s852 = scalar_lea.hbm %s4, %s21
          %s854 = sshll.u32 %s834, 4
          %s855 = int_to_ptr.vmem [resolvable:$true] %s854
          %s856 = sshll.u32 %s852, 4
          %s857 = int_to_ptr.hbm [resolvable:$true] %s856
          %859 = dma.vmem_to_hbm [thread:$0]  %s855, 16, %s857, %s832
        $region48: #{tpu_custom_call.1} parent=31 // pred_fallthru
          _
        // Predicated region
        $region49: #{tpu_custom_call.1} parent=31 // pred_check
          %p860 = pneg %p154
        $region50: #{tpu_custom_call.1} parent=31 // pred_check_branch
          %862 = sbr.rel (%p860) target = $region52
        $region51: #{tpu_custom_call.1} parent=31 // pred_region
          _
        $region52: #{tpu_custom_call.1} parent=31 // pred_fallthru
          _
        // Predicated region
        $region53: #{tpu_custom_call.1} parent=31 // pred_check
          %p863 = pneg %p107
        $region54: #{tpu_custom_call.1} parent=31 // pred_check_branch
          %865 = sbr.rel (%p863) target = $region56
        $region55: #{tpu_custom_call.1} parent=31 // pred_region
          %867 = dma.done [#allocation6], 128
        $region56: #{tpu_custom_call.1} parent=31 // pred_fallthru
          _
        // Predicated region
        $region57: #{tpu_custom_call.1} parent=31 // pred_check
          %p868 = pneg %p154
        $region58: #{tpu_custom_call.1} parent=31 // pred_check_branch
          %870 = sbr.rel (%p868) target = $region60
        $region59: #{tpu_custom_call.1} parent=31 // pred_region
          _
        $region60: #{tpu_custom_call.1} parent=31 // pred_fallthru
          _
      $region32: #{tpu_custom_call.1} parent=5 // pred_fallthru
        _
      %p871 = scmp.le.s32.totalorder 2, %s16
      // Predicated region
      $region61: #{tpu_custom_call.1} parent=5 // pred_check
        %p872 = pneg %p871
      $region62: #{tpu_custom_call.1} parent=5 // pred_check_branch
        %874 = sbr.rel (%p872) target = $region64
      $region63: #{tpu_custom_call.1} parent=5 // pred_region
        %s875 = ssub.s32 %s16, 2
        // Predicated region
        $region65: #{tpu_custom_call.1} parent=63 // pred_check
          %p876 = pneg %p139
        $region66: #{tpu_custom_call.1} parent=63 // pred_check_branch
          %878 = sbr.rel (%p876) target = $region68
        $region67: #{tpu_custom_call.1} parent=63 // pred_region
          %s879 = sand.u32 %s124, 1
          %s880 = scalar_lea.sflag [#allocation8], %s879
          %s881 = sand.u32 %s124, 1
          %s882 = scalar_lea.vmem [#allocation7], %s881
          %884 = dma.done %s880, 16
        $region68: #{tpu_custom_call.1} parent=63 // pred_fallthru
          _
      $region64: #{tpu_custom_call.1} parent=5 // pred_fallthru
        _
    $region6: #{tpu_custom_call.1} parent=1 // loop_footer
      %s20 = sadd.s32 1, %s16
    $region7: #{tpu_custom_call.1} parent=1 // loop_footer_branch
      %15 = sbr.rel target = $region3
    $region8: #{tpu_custom_call.1} parent=1 // loop_exit
      _
    %885 = vsyncpa [#allocation6], 1
    %s886 = scalar_lea.sflag [#allocation6], 1
    %887 = vsyncpa %s886, 1
    %888 = vsyncpa [#allocation8], 1
    %s889 = scalar_lea.sflag [#allocation8], 1
    %890 = vsyncpa %s889, 1

</llo_original>
